<compile_context>
chip_gen: v6e
topology: v6e:2x2x1
jax: 0.10.0
libtpu: 0.0.40
codegen_flags: <defaults>
</compile_context>

<pallas_src>
import jax
import jax.numpy as jnp
from jax.experimental import pallas as pl
from jax.experimental.pallas import tpu as pltpu

_LANE = 128
_TARGET_BLOCK_BYTES = 2 * 1024 * 1024  # ~2 MiB per block (safe on v5e/v6e/v7x)


def _silu_kernel(x_ref, o_ref):
    x = x_ref[...]
    o_ref[...] = x * jax.nn.sigmoid(x)


def _choose_lane_width(n_pad: int) -> int:
    # Widest lane-dense slab that divides the (128-aligned) element count.
    for cand in (4096, 2048, 1024, 512, 256):
        if n_pad % cand == 0:
            return cand
    return _LANE


def _choose_block_rows(rows: int, width: int, itemsize: int) -> int:
    # As many rows as fit in the target block budget, rounded to a multiple
    # of 8 (sublane constraint for non-full blocks).
    rows_budget = max(8, (_TARGET_BLOCK_BYTES // (width * itemsize)) // 8 * 8)
    if rows_budget >= rows:
        # Whole array fits in one block.  If large enough, split into 2 grid
        # steps so v7x can use both TensorCores.
        if rows >= 16:
            block_rows = ((rows + 1) // 2 + 7) // 8 * 8
            if block_rows >= rows:
                block_rows = rows
            return block_rows
        return rows  # full-extent block (always layout-legal)
    return rows_budget


def silu_pallas(x: jnp.ndarray) -> jnp.ndarray:
    """Elementwise SiLU matching torch semantics (input * sigmoid(input))."""
    orig_shape = x.shape
    dtype = x.dtype
    n = x.size
    itemsize = jnp.dtype(dtype).itemsize

    x_flat = x.reshape(-1)

    # Only pad when n is not 128-aligned (pad amount < 128 elements).
    n_pad = pl.cdiv(n, _LANE) * _LANE
    padded = n_pad != n
    if padded:
        x_flat = jnp.pad(x_flat, (0, n_pad - n))

    width = _choose_lane_width(n_pad)
    rows = n_pad // width
    x2d = x_flat.reshape(rows, width)

    block_rows = _choose_block_rows(rows, width, itemsize)
    grid = (pl.cdiv(rows, block_rows),)

    out2d = pl.pallas_call(
        _silu_kernel,
        out_shape=jax.ShapeDtypeStruct((rows, width), dtype),
        grid_spec=pltpu.PrefetchScalarGridSpec(
            num_scalar_prefetch=0,
            grid=grid,
            in_specs=[pl.BlockSpec((block_rows, width), lambda i: (i, 0))],
            out_specs=pl.BlockSpec((block_rows, width), lambda i: (i, 0)),
        ),
        compiler_params=pltpu.CompilerParams(
            dimension_semantics=("parallel",),
        ),
    )(x2d)

    if padded:
        return out2d.reshape(-1)[:n].reshape(orig_shape)
    return out2d.reshape(orig_shape)


if __name__ == "__main__":
    key = jax.random.PRNGKey(0)
    # NCHW input, small shapes consistent with a CIFAR-style model.
    x = jax.random.normal(key, (2, 4, 16, 16), dtype=jnp.float32)

    y = silu_pallas(x)
    jax.block_until_ready(y)

    # Correctness check against a pure-JAX reference.
    y_ref = x * jax.nn.sigmoid(x)
    assert y.shape == x.shape and y.dtype == x.dtype
    assert jnp.allclose(y, y_ref, atol=1e-6, rtol=1e-6), "mismatch vs reference"

    print("KERNEL_OK")
</pallas_src>

<mosaic_0001>
module attributes {stable_mosaic.version = 11 : i64} {
  func.func @_silu_kernel(%arg0: i32, %arg1: memref<1x2048xf32, #tpu.memory_space<vmem>>, %arg2: memref<1x2048xf32, #tpu.memory_space<vmem>>) attributes {dimension_semantics = [#tpu.dimension_semantics<parallel>], iteration_bounds = array<i64: 1>, scalar_prefetch = 0 : i64, scratch_operands = 0 : i64, tpu.core_type = #tpu.core_type<tc>, window_params = [{transform_indices = @transform_0, window_bounds = array<i64: 1, 2048>}, {transform_indices = @transform_1, window_bounds = array<i64: 1, 2048>}]} {
    %c0 = arith.constant 0 : index
    %c0_0 = arith.constant 0 : index
    %0 = vector.load %arg1[%c0, %c0_0] : memref<1x2048xf32, #tpu.memory_space<vmem>>, vector<1x2048xf32>
    %1 = arith.negf %0 : vector<1x2048xf32>
    %2 = math.exp %1 : vector<1x2048xf32>
    %cst = arith.constant 1.000000e+00 : f32
    %3 = vector.broadcast %cst : f32 to vector<1x2048xf32>
    %4 = arith.addf %3, %2 : vector<1x2048xf32>
    %5 = arith.divf %3, %4 : vector<1x2048xf32>
    %6 = arith.mulf %0, %5 : vector<1x2048xf32>
    %c0_1 = arith.constant 0 : index
    %c0_2 = arith.constant 0 : index
    %7 = vector.load %arg2[%c0_1, %c0_2] : memref<1x2048xf32, #tpu.memory_space<vmem>>, vector<1x2048xf32>
    tpu.vector_store %arg2[%c0_1, %c0_2], %6 {strides = array<i32>} : memref<1x2048xf32, #tpu.memory_space<vmem>>, vector<1x2048xf32>,
    return
  }
  func.func @transform_0(%arg0: i32) -> (i32, i32) {
    %c0_i32 = arith.constant 0 : i32
    %c0_i32_0 = arith.constant 0 : i32
    return %arg0, %c0_i32 : i32, i32
  }
  func.func @transform_1(%arg0: i32) -> (i32, i32) {
    %c0_i32 = arith.constant 0 : i32
    %c0_i32_0 = arith.constant 0 : i32
    return %arg0, %c0_i32 : i32, i32
  }
}

</mosaic_0001>

<llo_original>
// kernel: tpu_custom_call.1
$region0: #{tpu_custom_call.1}
  #allocation0 [shape = 'u32[]', space=smem, size = 0x4, offset = 0x4, fixed_abs, tag = 'smem constant byte address 0x4 - core index']
  #allocation1 [shape = 'u32[144,128]{1,0:T(1,128)}', space=vmem, size = 0x12000, scoped, tag = 'internal scratch']
  %s0 = inlined_call_operand.hbm [shape: f32[1,2048], index: 0, kind: input, shape index: {}]
  %s1 = inlined_call_operand.hbm [shape: f32[1,2048], index: 1, kind: output, shape index: {}]
  %s2 = sld [smem:[#allocation0]]
  $region18: #{tpu_custom_call.1} parent=0
    _
  %s4 = ssub.s32 1, %s2
  %s5 = scalar_select 0, %s4, %s2
  $region1: #{tpu_custom_call.1} parent=0
    #allocation2 [shape = 'u8[8192]{0}', space=vmem, size = 0x2000, scoped, tag = 'input window, operand 0, single buffered']
    #allocation3 [shape = 's32[1]{0}', space=sflag, size = 0x4, scoped, tag = 'scoped memory for tpu_custom_call.1']
    #allocation4 [shape = 's32[1]{0}', space=sflag, size = 0x4, scoped, tag = 'scoped memory for tpu_custom_call.1']
    #allocation5 [shape = 'u8[8192]{0}', space=vmem, size = 0x2000, scoped, tag = 'output window, operand 0, single buffered']
    %6 = vsyncpa [#allocation3], 0
    %7 = vsyncpa [#allocation4], 0
    // Predicated region
    $region2: #{tpu_custom_call.1} parent=1 // pred_check
      _
    $region3: #{tpu_custom_call.1} parent=1 // pred_check_branch
      %9 = sbr.rel (0) target = $region5
    $region4: #{tpu_custom_call.1} parent=1 // pred_region
      %s11 = ssub.s32 256, 256
      %12 = vsyncadd [#allocation3], %s11
      %s14 = sshll.u32 [#allocation2], 4
      %s15 = int_to_ptr.vmem [resolvable:$true] %s14
      %17 = dma.hbm_to_vmem [thread:$0]  %s0, 256, %s15, [#allocation3]
    $region5: #{tpu_custom_call.1} parent=1 // pred_fallthru
      _
    // Predicated region
    $region6: #{tpu_custom_call.1} parent=1 // pred_check
      _
    $region7: #{tpu_custom_call.1} parent=1 // pred_check_branch
      %19 = sbr.rel (0) target = $region9
    $region8: #{tpu_custom_call.1} parent=1 // pred_region
      %20 = dma.done [#allocation3], 256
    $region9: #{tpu_custom_call.1} parent=1 // pred_fallthru
      _
    %v21 = vld [vmem:[#allocation2] sm:$0xff]
    %v22 = vld [vmem:[#allocation2 + $0x8] sm:$0xff]
    %v23 = vxor.u32 %v21, 2147483648
    %v24 = vxor.u32 %v22, 2147483648
    %v25 = vmul.f32 %v23, 1.442695
    %v26 = vpow.pop %v25
    %v27 = vmul.f32 %v24, 1.442695
    %v28 = vpow.pop %v27
    %v29 = vadd.f32 %v26, 1.0
    %v30 = vadd.f32 %v28, 1.0
    %v31 = vrcp.pop %v29
    %v32 = vmul.f32 1.0, %v31
    %v33 = vrcp.pop %v30
    %v34 = vmul.f32 1.0, %v33
    %v35 = vmul.f32 %v21, %v32
    %v36 = vmul.f32 %v22, %v34
    %37 = vst [vmem:[#allocation5] sm:$0xff] %v35
    %38 = vst [vmem:[#allocation5 + $0x8] sm:$0xff] %v36
    // Predicated region
    $region10: #{tpu_custom_call.1} parent=1 // pred_check
      _
    $region11: #{tpu_custom_call.1} parent=1 // pred_check_branch
      %40 = sbr.rel (0) target = $region13
    $region12: #{tpu_custom_call.1} parent=1 // pred_region
      %s42 = ssub.s32 256, 256
      %43 = vsyncadd [#allocation4], %s42
      %s45 = sshll.u32 [#allocation5], 4
      %s46 = int_to_ptr.vmem [resolvable:$true] %s45
      %48 = dma.vmem_to_hbm [thread:$0]  %s46, 256, %s1, [#allocation4]
    $region13: #{tpu_custom_call.1} parent=1 // pred_fallthru
      _
    // Predicated region
    $region14: #{tpu_custom_call.1} parent=1 // pred_check
      _
    $region15: #{tpu_custom_call.1} parent=1 // pred_check_branch
      %50 = sbr.rel (0) target = $region17
    $region16: #{tpu_custom_call.1} parent=1 // pred_region
      %51 = dma.done [#allocation4], 256
    $region17: #{tpu_custom_call.1} parent=1 // pred_fallthru
      _
    %52 = vsyncpa [#allocation3], 1
    %53 = vsyncpa [#allocation4], 1

</llo_original>
